<compile_context>
chip_gen: v5e
topology: v5e:2x2
jax: 0.10.0
libtpu: 0.0.40
codegen_flags: <defaults>
</compile_context>

<pallas_src>
import jax
import jax.numpy as jnp
from jax.experimental import pallas as pl
from jax.experimental.pallas import tpu as pltpu

_SMALL_FASTPATH_BYTES = 1 << 20  # below ~1 MiB: skip pallas_call entirely


def _noop_alias_kernel(x_ref, o_ref):
    # BaseModel.forward performs no computation. The output HBM buffer is
    # aliased to the input (input_output_aliases={0: 0}), so the data is
    # already in place: no DMA, no VMEM round trip, zero HBM traffic.
    del x_ref, o_ref


def _pallas_identity(x: jax.Array) -> jax.Array:
    """Aliased, zero-traffic Pallas realization of the no-op forward."""
    return pl.pallas_call(
        _noop_alias_kernel,
        out_shape=jax.ShapeDtypeStruct(x.shape, x.dtype),
        # Raw HBM refs on both sides: no BlockSpec tiling, no auto-DMA.
        in_specs=[pl.BlockSpec(memory_space=pl.ANY)],
        out_specs=pl.BlockSpec(memory_space=pl.ANY),
        # Output buffer aliases the input buffer; with donation at the jit
        # boundary this is a true in-place alias (no allocation, no copy).
        input_output_aliases={0: 0},
        compiler_params=pltpu.CompilerParams(has_side_effects=True),
        cost_estimate=pl.CostEstimate(flops=0, transcendentals=0,
                                      bytes_accessed=0),
    )(x)


def base_model_forward(x: jax.Array, *,
                       small_fastpath_bytes: int = _SMALL_FASTPATH_BYTES
                       ) -> jax.Array:
    """Pallas realization of BaseModel.forward (identity / no-op).

    Accepts any array (e.g. NCHW [N, C, H, W]) and returns the same values.
    For best performance the caller should donate `x` at the jit boundary
    (jax.jit(..., donate_argnums=0)) so the aliased output reuses x's buffer.
    """
    nbytes = x.size * jnp.dtype(x.dtype).itemsize
    if nbytes < small_fastpath_bytes:
        # Tiny tensors: the fixed pallas_call overhead (a few us) dominates;
        # forward() is a no-op, so just return the input.
        return x
    return _pallas_identity(x)


if __name__ == "__main__":
    key = jax.random.PRNGKey(0)
    # Small NCHW input consistent with a conv-style model that would subclass
    # BaseModel.
    x = jax.random.normal(key, (2, 4, 16, 16), dtype=jnp.float32)
    x_host = jax.device_get(x)  # keep a host copy; x is donated below

    # Force the Pallas path (small_fastpath_bytes=0) so the kernel actually
    # runs on this small test input, and donate x so input_output_aliases is
    # a true alias (no defensive copy, no separate output allocation).
    fwd = jax.jit(lambda a: base_model_forward(a, small_fastpath_bytes=0),
                  donate_argnums=0)
    y = jax.block_until_ready(fwd(x))

    assert y.shape == x_host.shape and y.dtype == x_host.dtype
    assert bool(jnp.allclose(y, jnp.asarray(x_host)))

    # Also exercise the default small-input fast path (no pallas_call).
    x2 = jax.random.normal(jax.random.PRNGKey(0), (2, 4, 16, 16),
                           dtype=jnp.float32)
    y2 = jax.block_until_ready(jax.jit(base_model_forward)(x2))
    assert bool(jnp.allclose(y2, x2))

    print("KERNEL_OK")
</pallas_src>

<mosaic_0001>
module attributes {stable_mosaic.version = 11 : i64} {
  func.func @_noop_alias_kernel(%arg0: memref<2x4x16x16xf32, #tpu.memory_space<any>>, %arg1: memref<2x4x16x16xf32, #tpu.memory_space<any>>) attributes {dimension_semantics = [], scalar_prefetch = 0 : i64, scratch_operands = 0 : i64, tpu.core_type = #tpu.core_type<tc>} {
    return
  }
}

</mosaic_0001>

<llo_original>
// kernel: _lambda_.1
$region0: #{_lambda_.1}
  #allocation0 [shape = 'u32[]', space=smem, size = 0x4, offset = 0x4, fixed_abs, tag = 'smem constant byte address 0x4 - core index']
  #allocation1 [shape = 'u32[72,128]{1,0:T(1,128)}', space=vmem, size = 0x9000, scoped, tag = 'internal scratch']
  %s0 = inlined_call_operand.hbm [shape: f32[2,4,16,16], index: 0, kind: input, shape index: {}, may-alias: {0,1}]
  %s1 = inlined_call_operand.hbm [shape: f32[2,4,16,16], index: 1, kind: output, shape index: {}, may-alias: {0,1}]
  %s2 = sld [smem:[#allocation0]]
  $region2: #{_lambda_.1} parent=0
    _
  %s4 = ssub.s32 1, %s2
  %s5 = scalar_select 0, %s4, %s2

</llo_original>
